<compile_context>
chip_gen: v5e
topology: v5e:2x2
jax: 0.10.0
libtpu: 0.0.40
codegen_flags: <defaults>
</compile_context>

<pallas_src>
from functools import partial

import jax
import jax.numpy as jnp
from jax.experimental import pallas as pl
from jax.experimental.pallas import tpu as pltpu


# ----------------------------- pass 1: channel gate -----------------------------

def _chan_gate_kernel(x_ref, w1_ref, b1_ref, w2_ref, b2_ref, gate_ref, acc_ref,
                      *, inv_hw, hw, tile_hw, needs_mask):
    # x_ref block: (nb, C, TILE_HW); acc_ref scratch: (nb, C, 1) f32;
    # gate_ref block: (nb, C, 1) f32.
    t = pl.program_id(1)

    @pl.when(t == 0)
    def _():
        acc_ref[...] = jnp.zeros_like(acc_ref)

    x = x_ref[...].astype(jnp.float32)                     # (nb, C, TILE_HW)
    if needs_mask:
        # cdiv grid: padded lanes of the tail tile are not guaranteed zero.
        lane = jax.lax.broadcasted_iota(jnp.int32, x.shape, 2)
        x = jnp.where(t * tile_hw + lane < hw, x, 0.0)
    acc_ref[...] += jnp.sum(x, axis=2, keepdims=True)      # (nb, C, 1) partial sums

    @pl.when(t == pl.num_programs(1) - 1)
    def _():
        nb = acc_ref.shape[0]
        # cSE MLP per batch in the block (tiny, cold epilogue; nb is static).
        for i in range(nb):
            mean = acc_ref[i] * inv_hw                     # (C, 1) global avg pool
            z1 = jnp.dot(w1_ref[...], mean,
                         preferred_element_type=jnp.float32) + b1_ref[...]   # (Cr, 1)
            z1 = jnp.maximum(z1, 0.0)
            z2 = jnp.dot(w2_ref[...], z1,
                         preferred_element_type=jnp.float32) + b2_ref[...]   # (C, 1)
            gate_ref[i] = jax.nn.sigmoid(z2)


# ----------------------------- pass 2: gate apply --------------------------------

def _apply_kernel(x_ref, gate_ref, w3_ref, b3_ref, o_ref):
    # x_ref/o_ref: (nb, C, TILE_HW); gate_ref: (nb, C, 1); w3_ref: (1, C); b3: SMEM (1,1)
    w3 = w3_ref[...].astype(jnp.float32)                   # (1, C)
    b3 = b3_ref[0, 0]
    nb = x_ref.shape[0]
    for i in range(nb):
        x = x_ref[i].astype(jnp.float32)                   # (C, TILE_HW)
        ch = gate_ref[i]                                   # (C, 1) channel gate

        # sSE: 1x1 conv to 1 channel == (1, C) @ (C, TILE_HW) on the MXU (kept there:
        # the vector-extended slot is otherwise idle and the matmul is DMA-hidden).
        sp = jnp.dot(w3, x, preferred_element_type=jnp.float32) + b3   # (1, TILE_HW)
        sp = jax.nn.sigmoid(sp)

        # Fused combine: x*cSE + x*sSE == x * (cSE + sSE)
        o_ref[i] = (x * (ch + sp)).astype(o_ref.dtype)


# ----------------------------- sizing helpers -------------------------------------

_MAX_NB = 16  # cap on batches per block (bounds code unroll / block size)


def _vmem_limit_bytes():
    """Generation-aware scoped-VMEM request: 3/4 of capacity, capped at 96 MiB.
    v5e/v6e (128 MiB) -> 96 MiB; v7x (64 MiB) -> 48 MiB; unknown -> 48 MiB."""
    cap = 64 * 1024 * 1024
    try:
        cap = int(pltpu.get_tpu_info().vmem_capacity_bytes)
    except Exception:
        pass
    return min((cap * 3) // 4, 96 * 1024 * 1024)


def _plan_blocks(n, c, hw, itemsize, budget_bytes):
    """Return (nb, tile_hw, n_tiles, needs_tail_mask) for an x block of (nb, C, tile_hw).

    If a whole (C, HW) plane fits the budget, take the full spatial extent and pack
    as many batches as possible (nb divides N). Otherwise tile HW in multiples of
    128 lanes with a cdiv grid (tail tile masked/auto-masked)."""
    plane_bytes = c * hw * itemsize
    if plane_bytes <= budget_bytes:
        cap = min(max(budget_bytes // plane_bytes, 1), _MAX_NB)
        nb = max(d for d in range(1, n + 1) if n % d == 0 and d <= cap)
        return nb, hw, 1, False
    max_lanes = budget_bytes // (c * itemsize)
    tile_hw = min(max((max_lanes // 128) * 128, 128), hw)
    n_tiles = -(-hw // tile_hw)
    return 1, tile_hw, n_tiles, (hw % tile_hw != 0)


# ----------------------------- wrapper -------------------------------------------

def scse_pallas(x_nchw, w1, b1, w2, b2, w3, b3):
    """SCSE forward.

    x_nchw: (N, C, H, W), float32 or bfloat16 (output matches input dtype;
            all in-kernel math/accumulation is float32).
    Weights in PyTorch conv-1x1 matrix form:
      w1:(Cr,C) b1:(Cr,1)   w2:(C,Cr) b2:(C,1)   w3:(1,C) b3:(1,1)
    """
    N, C, H, W = x_nchw.shape
    HW = H * W
    Cr = w1.shape[0]

    x = x_nchw.reshape(N, C, HW)                    # free reshape, no transpose
    itemsize = x.dtype.itemsize

    vmem_limit = _vmem_limit_bytes()
    # Pass 1 double-buffers only the x input; pass 2 double-buffers x in + out.
    budget1 = min(vmem_limit // 3, 16 * 1024 * 1024)
    budget2 = min(vmem_limit // 5, 12 * 1024 * 1024)

    nb1, thw1, nt1, mask1 = _plan_blocks(N, C, HW, itemsize, budget1)
    nb2, thw2, nt2, _ = _plan_blocks(N, C, HW, itemsize, budget2)

    # Tiny weights: keep f32 regardless of activation dtype.
    w1 = w1.astype(jnp.float32)
    b1 = b1.astype(jnp.float32)
    w2 = w2.astype(jnp.float32)
    b2 = b2.astype(jnp.float32)
    w3 = w3.astype(jnp.float32)
    b3 = b3.astype(jnp.float32)

    # ---- pass 1: per-batch channel gate (reduction over HW, tiny MLP on last tile)
    ch_gate = pl.pallas_call(
        partial(_chan_gate_kernel, inv_hw=1.0 / HW, hw=HW, tile_hw=thw1,
                needs_mask=mask1),
        out_shape=jax.ShapeDtypeStruct((N, C, 1), jnp.float32),
        grid_spec=pltpu.PrefetchScalarGridSpec(
            num_scalar_prefetch=0,
            grid=(N // nb1, nt1),
            in_specs=[
                pl.BlockSpec((nb1, C, thw1), lambda n, t: (n, 0, t)),   # x tile
                pl.BlockSpec((Cr, C), lambda n, t: (0, 0)),             # w1 (resident)
                pl.BlockSpec((Cr, 1), lambda n, t: (0, 0)),             # b1
                pl.BlockSpec((C, Cr), lambda n, t: (0, 0)),             # w2
                pl.BlockSpec((C, 1), lambda n, t: (0, 0)),              # b2
            ],
            out_specs=pl.BlockSpec((nb1, C, 1), lambda n, t: (n, 0, 0)),  # resident over t
            scratch_shapes=[pltpu.VMEM((nb1, C, 1), jnp.float32)],
        ),
        compiler_params=pltpu.CompilerParams(
            dimension_semantics=("parallel", "arbitrary"),
            vmem_limit_bytes=vmem_limit),
    )(x, w1, b1, w2, b2)

    # ---- pass 2: sSE matmul + fused gate apply, fully parallel tiling
    out = pl.pallas_call(
        _apply_kernel,
        out_shape=jax.ShapeDtypeStruct((N, C, HW), x.dtype),
        grid_spec=pltpu.PrefetchScalarGridSpec(
            num_scalar_prefetch=0,
            grid=(N // nb2, nt2),
            in_specs=[
                pl.BlockSpec((nb2, C, thw2), lambda n, t: (n, 0, t)),   # x tile
                pl.BlockSpec((nb2, C, 1), lambda n, t: (n, 0, 0)),      # channel gate
                pl.BlockSpec((1, C), lambda n, t: (0, 0)),              # w3 (resident)
                pl.BlockSpec(memory_space=pltpu.MemorySpace.SMEM),      # b3 scalar
            ],
            out_specs=pl.BlockSpec((nb2, C, thw2), lambda n, t: (n, 0, t)),
        ),
        compiler_params=pltpu.CompilerParams(
            dimension_semantics=("parallel", "parallel"),
            vmem_limit_bytes=vmem_limit),
    )(x, ch_gate, w3, b3)

    return out.reshape(N, C, H, W)


# ----------------------------- pure-JAX reference --------------------------------

def scse_reference(x_nchw, w1, b1, w2, b2, w3, b3):
    """Replicates the PyTorch forward exactly (NCHW, conv-1x1 as matmul)."""
    N, C, H, W = x_nchw.shape
    x = x_nchw.reshape(N, C, H * W).astype(jnp.float32)
    mean = jnp.mean(x, axis=2, keepdims=True)                           # (N, C, 1)
    z1 = jnp.maximum(jnp.einsum('rc,ncx->nrx', w1, mean) + b1[None], 0.0)
    ch = jax.nn.sigmoid(jnp.einsum('cr,nrx->ncx', w2, z1) + b2[None])   # (N, C, 1)
    sp = jax.nn.sigmoid(jnp.einsum('oc,ncx->nox', w3, x) + b3[None])    # (N, 1, HW)
    out = x * ch + x * sp
    return out.reshape(N, C, H, W)


if __name__ == "__main__":
    # Small shapes consistent with the module (reduction=16 => C >= 16).
    N, C, H, W = 2, 32, 16, 16
    reduction = 16
    Cr = C // reduction

    key = jax.random.PRNGKey(0)
    kx, k1, kb1, k2, kb2, k3, kb3 = jax.random.split(key, 7)

    x = jax.random.normal(kx, (N, C, H, W), dtype=jnp.float32)

    # Conv-1x1 weights in matrix form matching torch shapes (squeezed kernel dims).
    w1 = jax.random.normal(k1, (Cr, C), dtype=jnp.float32) * 0.1   # Conv2d(C, Cr, 1).weight
    b1 = jax.random.normal(kb1, (Cr, 1), dtype=jnp.float32) * 0.1
    w2 = jax.random.normal(k2, (C, Cr), dtype=jnp.float32) * 0.1   # Conv2d(Cr, C, 1).weight
    b2 = jax.random.normal(kb2, (C, 1), dtype=jnp.float32) * 0.1
    w3 = jax.random.normal(k3, (1, C), dtype=jnp.float32) * 0.1    # Conv2d(C, 1, 1).weight
    b3 = jax.random.normal(kb3, (1, 1), dtype=jnp.float32) * 0.1

    # f32 boundary: tight match against the PyTorch-equivalent reference.
    out = jax.block_until_ready(scse_pallas(x, w1, b1, w2, b2, w3, b3))
    ref = scse_reference(x, w1, b1, w2, b2, w3, b3)
    assert out.shape == (N, C, H, W)
    assert out.dtype == jnp.float32
    assert jnp.allclose(out, ref, atol=1e-4, rtol=1e-4), "f32 mismatch vs reference"

    # bf16 boundary (the recommended deployment dtype for this memory-bound op);
    # in-kernel accumulation stays f32, so only boundary rounding -> relaxed tol.
    x_bf16 = x.astype(jnp.bfloat16)
    out_bf16 = jax.block_until_ready(scse_pallas(x_bf16, w1, b1, w2, b2, w3, b3))
    ref_bf16 = scse_reference(x_bf16.astype(jnp.float32), w1, b1, w2, b2, w3, b3)
    assert out_bf16.dtype == jnp.bfloat16
    assert jnp.allclose(out_bf16.astype(jnp.float32), ref_bf16,
                        atol=5e-2, rtol=5e-2), "bf16 mismatch vs reference"

    print("KERNEL_OK")
</pallas_src>

<mosaic_0001>
module attributes {stable_mosaic.version = 11 : i64} {
  func.func @_chan_gate_kernel(%arg0: i32, %arg1: i32, %arg2: memref<2x32x256xf32, #tpu.memory_space<vmem>>, %arg3: memref<2x32xf32, #tpu.memory_space<vmem>>, %arg4: memref<2x1xf32, #tpu.memory_space<vmem>>, %arg5: memref<32x2xf32, #tpu.memory_space<vmem>>, %arg6: memref<32x1xf32, #tpu.memory_space<vmem>>, %arg7: memref<2x32x1xf32, #tpu.memory_space<vmem>>, %arg8: memref<2x32x1xf32, #tpu.memory_space<vmem>>) attributes {dimension_semantics = [#tpu.dimension_semantics<parallel>, #tpu.dimension_semantics<arbitrary>], iteration_bounds = array<i64: 1, 1>, scalar_prefetch = 0 : i64, scratch_operands = 1 : i64, tpu.core_type = #tpu.core_type<tc>, window_params = [{transform_indices = @transform_0, window_bounds = array<i64: 2, 32, 256>}, {pipeline_mode = #tpu.pipeline_mode<synchronous>, transform_indices = @transform_1, window_bounds = array<i64: 2, 32>}, {pipeline_mode = #tpu.pipeline_mode<synchronous>, transform_indices = @transform_2, window_bounds = array<i64: 2, 1>}, {pipeline_mode = #tpu.pipeline_mode<synchronous>, transform_indices = @transform_3, window_bounds = array<i64: 32, 2>}, {pipeline_mode = #tpu.pipeline_mode<synchronous>, transform_indices = @transform_4, window_bounds = array<i64: 32, 1>}, {transform_indices = @transform_5, window_bounds = array<i64: 2, 32, 1>}]} {
    %c0_i32 = arith.constant 0 : i32
    %0 = arith.cmpi eq, %arg1, %c0_i32 : i32
    %1 = arith.extui %0 : i1 to i32
    %c0_i32_0 = arith.constant 0 : i32
    %2 = arith.cmpi ne, %1, %c0_i32_0 : i32
    scf.if %2 {
      %cst_11 = arith.constant 0.000000e+00 : f32
      %12 = vector.broadcast %cst_11 : f32 to vector<2x32x1xf32>
      %c0_12 = arith.constant 0 : index
      %c0_13 = arith.constant 0 : index
      %c0_14 = arith.constant 0 : index
      %13 = vector.load %arg8[%c0_12, %c0_13, %c0_14] : memref<2x32x1xf32, #tpu.memory_space<vmem>>, vector<2x32x1xf32>
      tpu.vector_store %arg8[%c0_12, %c0_13, %c0_14], %12 {strides = array<i32>} : memref<2x32x1xf32, #tpu.memory_space<vmem>>, vector<2x32x1xf32>,
    } else {
    }
    %c0 = arith.constant 0 : index
    %c0_1 = arith.constant 0 : index
    %c0_2 = arith.constant 0 : index
    %3 = vector.load %arg2[%c0, %c0_1, %c0_2] : memref<2x32x256xf32, #tpu.memory_space<vmem>>, vector<2x32x256xf32>
    %c0_3 = arith.constant 0 : index
    %c0_4 = arith.constant 0 : index
    %c0_5 = arith.constant 0 : index
    %4 = vector.load %arg8[%c0_3, %c0_4, %c0_5] : memref<2x32x1xf32, #tpu.memory_space<vmem>>, vector<2x32x1xf32>
    %cst = arith.constant dense<0.000000e+00> : vector<2x32xf32>
    %5 = vector.multi_reduction <add>, %3, %cst [2] : vector<2x32x256xf32> to vector<2x32xf32>
    %6 = vector.shape_cast %5 : vector<2x32xf32> to vector<2x32x1xf32>
    %7 = arith.addf %4, %6 : vector<2x32x1xf32>
    %c0_6 = arith.constant 0 : index
    %c0_7 = arith.constant 0 : index
    %c0_8 = arith.constant 0 : index
    %8 = vector.load %arg8[%c0_6, %c0_7, %c0_8] : memref<2x32x1xf32, #tpu.memory_space<vmem>>, vector<2x32x1xf32>
    tpu.vector_store %arg8[%c0_6, %c0_7, %c0_8], %7 {strides = array<i32>} : memref<2x32x1xf32, #tpu.memory_space<vmem>>, vector<2x32x1xf32>,
    %c0_i32_9 = arith.constant 0 : i32
    %9 = arith.cmpi eq, %arg1, %c0_i32_9 : i32
    %10 = arith.extui %9 : i1 to i32
    %c0_i32_10 = arith.constant 0 : i32
    %11 = arith.cmpi ne, %10, %c0_i32_10 : i32
    scf.if %11 {
      %c0_11 = arith.constant 0 : index
      %c0_12 = arith.constant 0 : index
      %c0_13 = arith.constant 0 : index
      %12 = vector.load %arg8[%c0_11, %c0_12, %c0_13] : memref<2x32x1xf32, #tpu.memory_space<vmem>>, vector<1x32x1xf32>
      %13 = vector.shape_cast %12 : vector<1x32x1xf32> to vector<32x1xf32>
      %cst_14 = arith.constant 3.906250e-03 : f32
      %14 = vector.broadcast %cst_14 : f32 to vector<32x1xf32>
      %15 = arith.mulf %13, %14 : vector<32x1xf32>
      %c0_15 = arith.constant 0 : index
      %c0_16 = arith.constant 0 : index
      %16 = vector.load %arg3[%c0_15, %c0_16] : memref<2x32xf32, #tpu.memory_space<vmem>>, vector<2x32xf32>
      %cst_17 = arith.constant dense<0.000000e+00> : vector<2x1xf32>
      %17 = tpu.matmul %16, %15, %cst_17 {dimension_numbers = #tpu.dot_dimension_numbers<[1], [0], [0], [1], [0, 0, 1, 1], [], []>} : vector<2x32xf32>, vector<32x1xf32>, vector<2x1xf32> -> vector<2x1xf32>
      %c0_18 = arith.constant 0 : index
      %c0_19 = arith.constant 0 : index
      %18 = vector.load %arg4[%c0_18, %c0_19] : memref<2x1xf32, #tpu.memory_space<vmem>>, vector<2x1xf32>
      %19 = arith.addf %17, %18 : vector<2x1xf32>
      %cst_20 = arith.constant 0.000000e+00 : f32
      %20 = vector.broadcast %cst_20 : f32 to vector<2x1xf32>
      %21 = arith.maximumf %19, %20 : vector<2x1xf32>
      %c0_21 = arith.constant 0 : index
      %c0_22 = arith.constant 0 : index
      %22 = vector.load %arg5[%c0_21, %c0_22] : memref<32x2xf32, #tpu.memory_space<vmem>>, vector<32x2xf32>
      %cst_23 = arith.constant dense<0.000000e+00> : vector<32x1xf32>
      %23 = tpu.matmul %22, %21, %cst_23 {dimension_numbers = #tpu.dot_dimension_numbers<[1], [0], [0], [1], [0, 0, 1, 1], [], []>} : vector<32x2xf32>, vector<2x1xf32>, vector<32x1xf32> -> vector<32x1xf32>
      %c0_24 = arith.constant 0 : index
      %c0_25 = arith.constant 0 : index
      %24 = vector.load %arg6[%c0_24, %c0_25] : memref<32x1xf32, #tpu.memory_space<vmem>>, vector<32x1xf32>
      %25 = arith.addf %23, %24 : vector<32x1xf32>
      %26 = arith.negf %25 : vector<32x1xf32>
      %27 = math.exp %26 : vector<32x1xf32>
      %cst_26 = arith.constant 1.000000e+00 : f32
      %28 = vector.broadcast %cst_26 : f32 to vector<32x1xf32>
      %29 = arith.addf %28, %27 : vector<32x1xf32>
      %30 = arith.divf %28, %29 : vector<32x1xf32>
      %c0_27 = arith.constant 0 : index
      %c0_28 = arith.constant 0 : index
      %c0_29 = arith.constant 0 : index
      %31 = vector.load %arg7[%c0_27, %c0_28, %c0_29] : memref<2x32x1xf32, #tpu.memory_space<vmem>>, vector<1x32x1xf32>
      %32 = vector.shape_cast %31 : vector<1x32x1xf32> to vector<32x1xf32>
      %33 = vector.shape_cast %30 : vector<32x1xf32> to vector<1x32x1xf32>
      tpu.vector_store %arg7[%c0_27, %c0_28, %c0_29], %33 {strides = array<i32>} : memref<2x32x1xf32, #tpu.memory_space<vmem>>, vector<1x32x1xf32>,
      %c1 = arith.constant 1 : index
      %c0_30 = arith.constant 0 : index
      %c0_31 = arith.constant 0 : index
      %34 = vector.load %arg8[%c1, %c0_30, %c0_31] : memref<2x32x1xf32, #tpu.memory_space<vmem>>, vector<1x32x1xf32>
      %35 = vector.shape_cast %34 : vector<1x32x1xf32> to vector<32x1xf32>
      %cst_32 = arith.constant 3.906250e-03 : f32
      %36 = vector.broadcast %cst_32 : f32 to vector<32x1xf32>
      %37 = arith.mulf %35, %36 : vector<32x1xf32>
      %c0_33 = arith.constant 0 : index
      %c0_34 = arith.constant 0 : index
      %38 = vector.load %arg3[%c0_33, %c0_34] : memref<2x32xf32, #tpu.memory_space<vmem>>, vector<2x32xf32>
      %cst_35 = arith.constant dense<0.000000e+00> : vector<2x1xf32>
      %39 = tpu.matmul %38, %37, %cst_35 {dimension_numbers = #tpu.dot_dimension_numbers<[1], [0], [0], [1], [0, 0, 1, 1], [], []>} : vector<2x32xf32>, vector<32x1xf32>, vector<2x1xf32> -> vector<2x1xf32>
      %c0_36 = arith.constant 0 : index
      %c0_37 = arith.constant 0 : index
      %40 = vector.load %arg4[%c0_36, %c0_37] : memref<2x1xf32, #tpu.memory_space<vmem>>, vector<2x1xf32>
      %41 = arith.addf %39, %40 : vector<2x1xf32>
      %cst_38 = arith.constant 0.000000e+00 : f32
      %42 = vector.broadcast %cst_38 : f32 to vector<2x1xf32>
      %43 = arith.maximumf %41, %42 : vector<2x1xf32>
      %c0_39 = arith.constant 0 : index
      %c0_40 = arith.constant 0 : index
      %44 = vector.load %arg5[%c0_39, %c0_40] : memref<32x2xf32, #tpu.memory_space<vmem>>, vector<32x2xf32>
      %cst_41 = arith.constant dense<0.000000e+00> : vector<32x1xf32>
      %45 = tpu.matmul %44, %43, %cst_41 {dimension_numbers = #tpu.dot_dimension_numbers<[1], [0], [0], [1], [0, 0, 1, 1], [], []>} : vector<32x2xf32>, vector<2x1xf32>, vector<32x1xf32> -> vector<32x1xf32>
      %c0_42 = arith.constant 0 : index
      %c0_43 = arith.constant 0 : index
      %46 = vector.load %arg6[%c0_42, %c0_43] : memref<32x1xf32, #tpu.memory_space<vmem>>, vector<32x1xf32>
      %47 = arith.addf %45, %46 : vector<32x1xf32>
      %48 = arith.negf %47 : vector<32x1xf32>
      %49 = math.exp %48 : vector<32x1xf32>
      %cst_44 = arith.constant 1.000000e+00 : f32
      %50 = vector.broadcast %cst_44 : f32 to vector<32x1xf32>
      %51 = arith.addf %50, %49 : vector<32x1xf32>
      %52 = arith.divf %50, %51 : vector<32x1xf32>
      %c1_45 = arith.constant 1 : index
      %c0_46 = arith.constant 0 : index
      %c0_47 = arith.constant 0 : index
      %53 = vector.load %arg7[%c1_45, %c0_46, %c0_47] : memref<2x32x1xf32, #tpu.memory_space<vmem>>, vector<1x32x1xf32>
      %54 = vector.shape_cast %53 : vector<1x32x1xf32> to vector<32x1xf32>
      %55 = vector.shape_cast %52 : vector<32x1xf32> to vector<1x32x1xf32>
      tpu.vector_store %arg7[%c1_45, %c0_46, %c0_47], %55 {strides = array<i32>} : memref<2x32x1xf32, #tpu.memory_space<vmem>>, vector<1x32x1xf32>,
    } else {
    }
    return
  }
  func.func @transform_0(%arg0: i32, %arg1: i32) -> (i32, i32, i32) {
    %c0_i32 = arith.constant 0 : i32
    %c0_i32_0 = arith.constant 0 : i32
    return %arg0, %c0_i32, %arg1 : i32, i32, i32
  }
  func.func @transform_1(%arg0: i32, %arg1: i32) -> (i32, i32) {
    %c0_i32 = arith.constant 0 : i32
    %c0_i32_0 = arith.constant 0 : i32
    %c0_i32_1 = arith.constant 0 : i32
    return %c0_i32, %c0_i32_0 : i32, i32
  }
  func.func @transform_2(%arg0: i32, %arg1: i32) -> (i32, i32) {
    %c0_i32 = arith.constant 0 : i32
    %c0_i32_0 = arith.constant 0 : i32
    %c0_i32_1 = arith.constant 0 : i32
    return %c0_i32, %c0_i32_0 : i32, i32
  }
  func.func @transform_3(%arg0: i32, %arg1: i32) -> (i32, i32) {
    %c0_i32 = arith.constant 0 : i32
    %c0_i32_0 = arith.constant 0 : i32
    %c0_i32_1 = arith.constant 0 : i32
    return %c0_i32, %c0_i32_0 : i32, i32
  }
  func.func @transform_4(%arg0: i32, %arg1: i32) -> (i32, i32) {
    %c0_i32 = arith.constant 0 : i32
    %c0_i32_0 = arith.constant 0 : i32
    %c0_i32_1 = arith.constant 0 : i32
    return %c0_i32, %c0_i32_0 : i32, i32
  }
  func.func @transform_5(%arg0: i32, %arg1: i32) -> (i32, i32, i32) {
    %c0_i32 = arith.constant 0 : i32
    %c0_i32_0 = arith.constant 0 : i32
    %c0_i32_1 = arith.constant 0 : i32
    return %arg0, %c0_i32, %c0_i32_0 : i32, i32, i32
  }
}

</mosaic_0001>

<llo_original>
// kernel: tpu_custom_call.1
$region0: #{tpu_custom_call.1}
  #allocation0 [shape = 'u32[]', space=smem, size = 0x4, offset = 0x4, fixed_abs, tag = 'smem constant byte address 0x4 - core index']
  #allocation1 [shape = 'u32[72,128]{1,0:T(1,128)}', space=vmem, size = 0x9000, scoped, tag = 'internal scratch']
  #allocation2 [shape = 'f32[2,32,1]{2,1,0:T(8,128)}', space=vmem, size = 0x8000, scoped, tag = 'scratch operand']
  %s0 = inlined_call_operand.hbm [shape: f32[2,32,256], index: 0, kind: input, shape index: {}]
  %s1 = inlined_call_operand.vmem [shape: f32[2,32], index: 1, kind: input, shape index: {}]
  %s2 = inlined_call_operand.vmem [shape: f32[2,1], index: 2, kind: input, shape index: {}]
  %s3 = inlined_call_operand.vmem [shape: f32[32,2], index: 3, kind: input, shape index: {}]
  %s4 = inlined_call_operand.vmem [shape: f32[32,1], index: 4, kind: input, shape index: {}]
  %s5 = inlined_call_operand.vmem [shape: f32[2,32,1], index: 5, kind: output, shape index: {}]
  %s6 = sld [smem:[#allocation0]]
  $region42: #{tpu_custom_call.1} parent=0
    _
  %s8 = ssub.s32 1, %s6
  %s9 = scalar_select 0, %s8, %s6
  $region1: #{tpu_custom_call.1} parent=0
    #allocation3 [shape = 'u8[65536]{0}', space=vmem, size = 0x10000, scoped, tag = 'input window, operand 0, single buffered']
    #allocation4 [shape = 's32[1]{0}', space=sflag, size = 0x4, scoped, tag = 'scoped memory for tpu_custom_call.1']
    %10 = vsyncpa [#allocation4], 0
    // Predicated region
    $region2: #{tpu_custom_call.1} parent=1 // pred_check
      _
    $region3: #{tpu_custom_call.1} parent=1 // pred_check_branch
      %12 = sbr.rel (0) target = $region5
    $region4: #{tpu_custom_call.1} parent=1 // pred_region
      %14 = vsyncadd [#allocation4], 0
      %s15 = sshll.u32 %s0, 4
      %s16 = int_to_ptr.hbm [resolvable:$true] %s15
      %s17 = sshll.u32 [#allocation3], 4
      %s18 = int_to_ptr.vmem [resolvable:$true] %s17
      %23 = dma.hbm_to_vmem [thread:$0]  %s16, 2048, %s18, [#allocation4], 256, 256, 16
    $region5: #{tpu_custom_call.1} parent=1 // pred_fallthru
      _
    // Predicated region
    $region6: #{tpu_custom_call.1} parent=1 // pred_check
      _
    $region7: #{tpu_custom_call.1} parent=1 // pred_check_branch
      %25 = sbr.rel (0) target = $region9
    $region8: #{tpu_custom_call.1} parent=1 // pred_region
      _
    $region9: #{tpu_custom_call.1} parent=1 // pred_fallthru
      _
    // Predicated region
    $region10: #{tpu_custom_call.1} parent=1 // pred_check
      _
    $region11: #{tpu_custom_call.1} parent=1 // pred_check_branch
      %27 = sbr.rel (0) target = $region13
    $region12: #{tpu_custom_call.1} parent=1 // pred_region
      _
    $region13: #{tpu_custom_call.1} parent=1 // pred_fallthru
      _
    // Predicated region
    $region14: #{tpu_custom_call.1} parent=1 // pred_check
      _
    $region15: #{tpu_custom_call.1} parent=1 // pred_check_branch
      %29 = sbr.rel (0) target = $region17
    $region16: #{tpu_custom_call.1} parent=1 // pred_region
      _
    $region17: #{tpu_custom_call.1} parent=1 // pred_fallthru
      _
    // Predicated region
    $region18: #{tpu_custom_call.1} parent=1 // pred_check
      _
    $region19: #{tpu_custom_call.1} parent=1 // pred_check_branch
      %31 = sbr.rel (0) target = $region21
    $region20: #{tpu_custom_call.1} parent=1 // pred_region
      _
    $region21: #{tpu_custom_call.1} parent=1 // pred_fallthru
      _
    // Predicated region
    $region22: #{tpu_custom_call.1} parent=1 // pred_check
      _
    $region23: #{tpu_custom_call.1} parent=1 // pred_check_branch
      %33 = sbr.rel (0) target = $region25
    $region24: #{tpu_custom_call.1} parent=1 // pred_region
      %35 = dma.done [#allocation4], 2048
    $region25: #{tpu_custom_call.1} parent=1 // pred_fallthru
      _
    %p36 = scmp.eq.s32.totalorder 0, 0
    // Predicated region
    $region26: #{tpu_custom_call.1} parent=1 // pred_check
      %p37 = pneg %p36
    $region27: #{tpu_custom_call.1} parent=1 // pred_check_branch
      %39 = sbr.rel (%p37) target = $region29
    $region28: #{tpu_custom_call.1} parent=1 // pred_region
      %vm40 = vcmask 7168
      %41 = vst.msk [vmem:[#allocation2] sm:$0xff] %vm40, 0.0
      %42 = vst.msk [vmem:[#allocation2 + $0x8] sm:$0xff] %vm40, 0.0
      %43 = vst.msk [vmem:[#allocation2 + $0x10] sm:$0xff] %vm40, 0.0
      %44 = vst.msk [vmem:[#allocation2 + $0x18] sm:$0xff] %vm40, 0.0
      %45 = vst.msk [vmem:[#allocation2 + $0x20] sm:$0xff] %vm40, 0.0
      %46 = vst.msk [vmem:[#allocation2 + $0x28] sm:$0xff] %vm40, 0.0
      %47 = vst.msk [vmem:[#allocation2 + $0x30] sm:$0xff] %vm40, 0.0
      %48 = vst.msk [vmem:[#allocation2 + $0x38] sm:$0xff] %vm40, 0.0
    $region29: #{tpu_custom_call.1} parent=1 // pred_fallthru
      _
    %v49 = vld [vmem:[#allocation3] sm:$0xff]
    %v50 = vld [vmem:[#allocation3 + $0x8] sm:$0xff]
    %v51 = vld [vmem:[#allocation3 + $0x10] sm:$0xff]
    %v52 = vld [vmem:[#allocation3 + $0x18] sm:$0xff]
    %v53 = vld [vmem:[#allocation3 + $0x20] sm:$0xff]
    %v54 = vld [vmem:[#allocation3 + $0x28] sm:$0xff]
    %v55 = vld [vmem:[#allocation3 + $0x30] sm:$0xff]
    %v56 = vld [vmem:[#allocation3 + $0x38] sm:$0xff]
    %v57 = vld [vmem:[#allocation3 + $0x40] sm:$0xff]
    %v58 = vld [vmem:[#allocation3 + $0x48] sm:$0xff]
    %v59 = vld [vmem:[#allocation3 + $0x50] sm:$0xff]
    %v60 = vld [vmem:[#allocation3 + $0x58] sm:$0xff]
    %v61 = vld [vmem:[#allocation3 + $0x60] sm:$0xff]
    %v62 = vld [vmem:[#allocation3 + $0x68] sm:$0xff]
    %v63 = vld [vmem:[#allocation3 + $0x70] sm:$0xff]
    %v64 = vld [vmem:[#allocation3 + $0x78] sm:$0xff]
    %v65 = vld [vmem:[#allocation2] sm:$0xff]
    %v66 = vld [vmem:[#allocation2 + $0x8] sm:$0xff]
    %v67 = vld [vmem:[#allocation2 + $0x10] sm:$0xff]
    %v68 = vld [vmem:[#allocation2 + $0x18] sm:$0xff]
    %v69 = vld [vmem:[#allocation2 + $0x20] sm:$0xff]
    %v70 = vld [vmem:[#allocation2 + $0x28] sm:$0xff]
    %v71 = vld [vmem:[#allocation2 + $0x30] sm:$0xff]
    %v72 = vld [vmem:[#allocation2 + $0x38] sm:$0xff]
    %v73 = vadd.f32 %v49, %v50
    %74 = vadd.xlane.f32.xlu0 %v73
    %v75 = vpop.xlane.xlu0 %74
    %v76 = vadd.f32 %v51, %v52
    %77 = vadd.xlane.f32.xlu0 %v76
    %v78 = vpop.xlane.xlu0 %77
    %v79 = vadd.f32 %v53, %v54
    %80 = vadd.xlane.f32.xlu0 %v79
    %v81 = vpop.xlane.xlu0 %80
    %v82 = vadd.f32 %v55, %v56
    %83 = vadd.xlane.f32.xlu0 %v82
    %v84 = vpop.xlane.xlu0 %83
    %v85 = vadd.f32 %v57, %v58
    %86 = vadd.xlane.f32.xlu0 %v85
    %v87 = vpop.xlane.xlu0 %86
    %v88 = vadd.f32 %v59, %v60
    %89 = vadd.xlane.f32.xlu0 %v88
    %v90 = vpop.xlane.xlu0 %89
    %v91 = vadd.f32 %v61, %v62
    %92 = vadd.xlane.f32.xlu0 %v91
    %v93 = vpop.xlane.xlu0 %92
    %v94 = vadd.f32 %v63, %v64
    %95 = vadd.xlane.f32.xlu0 %v94
    %v96 = vpop.xlane.xlu0 %95
    %v97 = vadd.f32 %v65, %v75
    %v98 = vadd.f32 %v66, %v78
    %v99 = vadd.f32 %v67, %v81
    %v100 = vadd.f32 %v68, %v84
    %v101 = vadd.f32 %v69, %v87
    %v102 = vadd.f32 %v70, %v90
    %v103 = vadd.f32 %v71, %v93
    %v104 = vadd.f32 %v72, %v96
    %vm105 = vcmask 7168
    %106 = vst.msk [vmem:[#allocation2] sm:$0xff] %vm105, %v97
    %107 = vst.msk [vmem:[#allocation2 + $0x8] sm:$0xff] %vm105, %v98
    %108 = vst.msk [vmem:[#allocation2 + $0x10] sm:$0xff] %vm105, %v99
    %109 = vst.msk [vmem:[#allocation2 + $0x18] sm:$0xff] %vm105, %v100
    %110 = vst.msk [vmem:[#allocation2 + $0x20] sm:$0xff] %vm105, %v101
    %111 = vst.msk [vmem:[#allocation2 + $0x28] sm:$0xff] %vm105, %v102
    %112 = vst.msk [vmem:[#allocation2 + $0x30] sm:$0xff] %vm105, %v103
    %113 = vst.msk [vmem:[#allocation2 + $0x38] sm:$0xff] %vm105, %v104
    // Predicated region
    $region30: #{tpu_custom_call.1} parent=1 // pred_check
      %p114 = pneg %p36
    $region31: #{tpu_custom_call.1} parent=1 // pred_check_branch
      %116 = sbr.rel (%p114) target = $region33
    $region32: #{tpu_custom_call.1} parent=1 // pred_region
      %v117 = vld [vmem:[#allocation2] sm:$0xff]
      %v118 = vld [vmem:[#allocation2 + $0x8] sm:$0xff]
      %v119 = vld [vmem:[#allocation2 + $0x10] sm:$0xff]
      %v120 = vld [vmem:[#allocation2 + $0x18] sm:$0xff]
      %v121 = vmul.f32 %v117, 0.00390625
      %v122 = vmul.f32 %v118, 0.00390625
      %v123 = vmul.f32 %v119, 0.00390625
      %v124 = vmul.f32 %v120, 0.00390625
      %v125 = vld [vmem:[%s1] sm:$0x3]
      %v126 = vld [vmem:[%s2] sm:$0x3]
      %vm127 = vcmask 261120
      %v129 = vsel %vm127, %v125, 0
      %131 = vmatpush.msra.mxu0 0.0
      %132 = vmatpush.msra.mxu0 0.0
      %133 = vmatpush.msra.mxu0 0.0
      %134 = vmatpush.msra.mxu0 0.0
      %135 = vmatpush.msra.mxu0 0.0
      %136 = vmatpush.msra.mxu0 0.0
      %137 = vmatpush.msra.mxu0 0.0
      %138 = vmatpush.msra.mxu0 0.0
      %139 = vmatpush.msra.mxu0 0.0
      %140 = vmatpush.msra.mxu0 0.0
      %141 = vmatpush.msra.mxu0 0.0
      %142 = vmatpush.msra.mxu0 0.0
      %143 = vmatpush.msra.mxu0 %v124
      %144 = vmatpush.msra.mxu0 %v123
      %145 = vmatpush.msra.mxu0 %v122
      %146 = vmatpush.msra.mxu0 %v121
      %147 = vmatmul.f32.gmra.mxu0 %v129
      %v148 = vpop.f32.mrf.mxu0
      %v149 = vadd.f32 %v126, %v148
      %150 = vdwg.mxu0
      %v151 = vmax.f32 %v149, 0.0
      %v152 = vld [vmem:[%s3] sm:$0xff]
      %v153 = vld [vmem:[%s3 + $0x8] sm:$0xff]
      %v154 = vld [vmem:[%s3 + $0x10] sm:$0xff]
      %v155 = vld [vmem:[%s3 + $0x18] sm:$0xff]
      %v156 = vld [vmem:[%s4] sm:$0xff]
      %v157 = vld [vmem:[%s4 + $0x8] sm:$0xff]
      %v158 = vld [vmem:[%s4 + $0x10] sm:$0xff]
      %v159 = vld [vmem:[%s4 + $0x18] sm:$0xff]
      %vm160 = vcmask 15360
      %v162 = vsel %vm160, %v152, 0
      %v165 = vsel %vm160, %v153, 0
      %v168 = vsel %vm160, %v154, 0
      %v171 = vsel %vm160, %v155, 0
      %vm173 = vcmask 1041408
      %v175 = vsel %vm173, %v151, 0
      %177 = vmatpush.msra.mxu0 0.0
      %178 = vmatpush.msra.mxu0 0.0
      %179 = vmatpush.msra.mxu0 0.0
      %180 = vmatpush.msra.mxu0 0.0
      %181 = vmatpush.msra.mxu0 0.0
      %182 = vmatpush.msra.mxu0 0.0
      %183 = vmatpush.msra.mxu0 0.0
      %184 = vmatpush.msra.mxu0 0.0
      %185 = vmatpush.msra.mxu0 0.0
      %186 = vmatpush.msra.mxu0 0.0
      %187 = vmatpush.msra.mxu0 0.0
      %188 = vmatpush.msra.mxu0 0.0
      %189 = vmatpush.msra.mxu0 0.0
      %190 = vmatpush.msra.mxu0 0.0
      %191 = vmatpush.msra.mxu0 0.0
      %192 = vmatpush.msra.mxu0 %v175
      %193 = vmatmul.f32.gmra.mxu0 %v162
      %v194 = vpop.f32.mrf.mxu0
      %v195 = vadd.f32 %v156, %v194
      %196 = vmatmul.f32.gmra.mxu0 %v165
      %v197 = vpop.f32.mrf.mxu0
      %v198 = vadd.f32 %v157, %v197
      %199 = vmatmul.f32.gmra.mxu0 %v168
      %v200 = vpop.f32.mrf.mxu0
      %v201 = vadd.f32 %v158, %v200
      %202 = vmatmul.f32.gmra.mxu0 %v171
      %v203 = vpop.f32.mrf.mxu0
      %v204 = vadd.f32 %v159, %v203
      %205 = vdwg.mxu0
      %v206 = vxor.u32 %v195, 2147483648
      %v207 = vxor.u32 %v198, 2147483648
      %v208 = vxor.u32 %v201, 2147483648
      %v209 = vxor.u32 %v204, 2147483648
      %v210 = vmul.f32 %v206, 1.442695
      %v211 = vpow.pop %v210
      %v212 = vmul.f32 %v207, 1.442695
      %v213 = vpow.pop %v212
      %v214 = vmul.f32 %v208, 1.442695
      %v215 = vpow.pop %v214
      %v216 = vmul.f32 %v209, 1.442695
      %v217 = vpow.pop %v216
      %v218 = vadd.f32 %v211, 1.0
      %v219 = vadd.f32 %v213, 1.0
      %v220 = vadd.f32 %v215, 1.0
      %v221 = vadd.f32 %v217, 1.0
      %v222 = vrcp.pop %v218
      %v223 = vmul.f32 %v218, %v222
      %v224 = vsub.f32 1.0, %v223
      %v225 = vmul.f32 %v222, %v224
      %v226 = vadd.f32 %v222, %v225
      %vm227 = vweird.f32 %v218
      %vm228 = vweird.f32 %v222
      %vm229 = vmor %vm227, %vm228
      %v230 = vsel %vm229, %v222, %v226
      %v231 = vand.u32 2147483647, %v218
      %vm232 = vcmp.eq.f32.partialorder %v231, 8.507059e+37
      %v233 = vand.u32 %v218, 2147483648
      %v234 = vor.u32 1.1754944e-38, %v233
      %v235 = vsel %vm232, %v234, %v230
      %v236 = vmul.f32 1.0, %v235
      %v237 = vrcp.pop %v219
      %v238 = vmul.f32 %v219, %v237
      %v239 = vsub.f32 1.0, %v238
      %v240 = vmul.f32 %v237, %v239
      %v241 = vadd.f32 %v237, %v240
      %vm242 = vweird.f32 %v219
      %vm243 = vweird.f32 %v237
      %vm244 = vmor %vm242, %vm243
      %v245 = vsel %vm244, %v237, %v241
      %v246 = vand.u32 2147483647, %v219
      %vm247 = vcmp.eq.f32.partialorder %v246, 8.507059e+37
      %v248 = vand.u32 %v219, 2147483648
      %v249 = vor.u32 1.1754944e-38, %v248
      %v250 = vsel %vm247, %v249, %v245
      %v251 = vmul.f32 1.0, %v250
      %v252 = vrcp.pop %v220
      %v253 = vmul.f32 %v220, %v252
      %v254 = vsub.f32 1.0, %v253
      %v255 = vmul.f32 %v252, %v254
      %v256 = vadd.f32 %v252, %v255
      %vm257 = vweird.f32 %v220
      %vm258 = vweird.f32 %v252
      %vm259 = vmor %vm257, %vm258
      %v260 = vsel %vm259, %v252, %v256
      %v261 = vand.u32 2147483647, %v220
      %vm262 = vcmp.eq.f32.partialorder %v261, 8.507059e+37
      %v263 = vand.u32 %v220, 2147483648
      %v264 = vor.u32 1.1754944e-38, %v263
      %v265 = vsel %vm262, %v264, %v260
      %v266 = vmul.f32 1.0, %v265
      %v267 = vrcp.pop %v221
      %v268 = vmul.f32 %v221, %v267
      %v269 = vsub.f32 1.0, %v268
      %v270 = vmul.f32 %v267, %v269
      %v271 = vadd.f32 %v267, %v270
      %vm272 = vweird.f32 %v221
      %vm273 = vweird.f32 %v267
      %vm274 = vmor %vm272, %vm273
      %v275 = vsel %vm274, %v267, %v271
      %v276 = vand.u32 2147483647, %v221
      %vm277 = vcmp.eq.f32.partialorder %v276, 8.507059e+37
      %v278 = vand.u32 %v221, 2147483648
      %v279 = vor.u32 1.1754944e-38, %v278
      %v280 = vsel %vm277, %v279, %v275
      %v281 = vmul.f32 1.0, %v280
      %282 = vst.msk [vmem:[%s5] sm:$0xff] %vm105, %v236
      %283 = vst.msk [vmem:[%s5 + $0x8] sm:$0xff] %vm105, %v251
      %284 = vst.msk [vmem:[%s5 + $0x10] sm:$0xff] %vm105, %v266
      %285 = vst.msk [vmem:[%s5 + $0x18] sm:$0xff] %vm105, %v281
      %s286 = scalar_lea.vmem [#allocation2], 32
      %v287 = vld [vmem:[%s286] sm:$0xff]
      %v288 = vld [vmem:[%s286 + $0x8] sm:$0xff]
      %v289 = vld [vmem:[%s286 + $0x10] sm:$0xff]
      %v290 = vld [vmem:[%s286 + $0x18] sm:$0xff]
      %v291 = vmul.f32 %v287, 0.00390625
      %v292 = vmul.f32 %v288, 0.00390625
      %v293 = vmul.f32 %v289, 0.00390625
      %v294 = vmul.f32 %v290, 0.00390625
      %v295 = vld [vmem:[%s1] sm:$0x3]
      %v296 = vld [vmem:[%s2] sm:$0x3]
      %v298 = vsel %vm127, %v295, 0
      %300 = vmatpush.msra.mxu0 0.0
      %301 = vmatpush.msra.mxu0 0.0
      %302 = vmatpush.msra.mxu0 0.0
      %303 = vmatpush.msra.mxu0 0.0
      %304 = vmatpush.msra.mxu0 0.0
      %305 = vmatpush.msra.mxu0 0.0
      %306 = vmatpush.msra.mxu0 0.0
      %307 = vmatpush.msra.mxu0 0.0
      %308 = vmatpush.msra.mxu0 0.0
      %309 = vmatpush.msra.mxu0 0.0
      %310 = vmatpush.msra.mxu0 0.0
      %311 = vmatpush.msra.mxu0 0.0
      %312 = vmatpush.msra.mxu0 %v294
      %313 = vmatpush.msra.mxu0 %v293
      %314 = vmatpush.msra.mxu0 %v292
      %315 = vmatpush.msra.mxu0 %v291
      %316 = vmatmul.f32.gmra.mxu0 %v298
      %v317 = vpop.f32.mrf.mxu0
      %v318 = vadd.f32 %v296, %v317
      %319 = vdwg.mxu0
      %v320 = vmax.f32 %v318, 0.0
      %v321 = vld [vmem:[%s3] sm:$0xff]
      %v322 = vld [vmem:[%s3 + $0x8] sm:$0xff]
      %v323 = vld [vmem:[%s3 + $0x10] sm:$0xff]
      %v324 = vld [vmem:[%s3 + $0x18] sm:$0xff]
      %v325 = vld [vmem:[%s4] sm:$0xff]
      %v326 = vld [vmem:[%s4 + $0x8] sm:$0xff]
      %v327 = vld [vmem:[%s4 + $0x10] sm:$0xff]
      %v328 = vld [vmem:[%s4 + $0x18] sm:$0xff]
      %v330 = vsel %vm160, %v321, 0
      %v333 = vsel %vm160, %v322, 0
      %v336 = vsel %vm160, %v323, 0
      %v339 = vsel %vm160, %v324, 0
      %v342 = vsel %vm173, %v320, 0
      %344 = vmatpush.msra.mxu0 0.0
      %345 = vmatpush.msra.mxu0 0.0
      %346 = vmatpush.msra.mxu0 0.0
      %347 = vmatpush.msra.mxu0 0.0
      %348 = vmatpush.msra.mxu0 0.0
      %349 = vmatpush.msra.mxu0 0.0
      %350 = vmatpush.msra.mxu0 0.0
      %351 = vmatpush.msra.mxu0 0.0
      %352 = vmatpush.msra.mxu0 0.0
      %353 = vmatpush.msra.mxu0 0.0
      %354 = vmatpush.msra.mxu0 0.0
      %355 = vmatpush.msra.mxu0 0.0
      %356 = vmatpush.msra.mxu0 0.0
      %357 = vmatpush.msra.mxu0 0.0
      %358 = vmatpush.msra.mxu0 0.0
      %359 = vmatpush.msra.mxu0 %v342
      %360 = vmatmul.f32.gmra.mxu0 %v330
      %v361 = vpop.f32.mrf.mxu0
      %v362 = vadd.f32 %v325, %v361
      %363 = vmatmul.f32.gmra.mxu0 %v333
      %v364 = vpop.f32.mrf.mxu0
      %v365 = vadd.f32 %v326, %v364
      %366 = vmatmul.f32.gmra.mxu0 %v336
      %v367 = vpop.f32.mrf.mxu0
      %v368 = vadd.f32 %v327, %v367
      %369 = vmatmul.f32.gmra.mxu0 %v339
      %v370 = vpop.f32.mrf.mxu0
      %v371 = vadd.f32 %v328, %v370
      %372 = vdwg.mxu0
      %v373 = vxor.u32 %v362, 2147483648
      %v374 = vxor.u32 %v365, 2147483648
      %v375 = vxor.u32 %v368, 2147483648
      %v376 = vxor.u32 %v371, 2147483648
      %v377 = vmul.f32 %v373, 1.442695
      %v378 = vpow.pop %v377
      %v379 = vmul.f32 %v374, 1.442695
      %v380 = vpow.pop %v379
      %v381 = vmul.f32 %v375, 1.442695
      %v382 = vpow.pop %v381
      %v383 = vmul.f32 %v376, 1.442695
      %v384 = vpow.pop %v383
      %v385 = vadd.f32 %v378, 1.0
      %v386 = vadd.f32 %v380, 1.0
      %v387 = vadd.f32 %v382, 1.0
      %v388 = vadd.f32 %v384, 1.0
      %v389 = vrcp.pop %v385
      %v390 = vmul.f32 %v385, %v389
      %v391 = vsub.f32 1.0, %v390
      %v392 = vmul.f32 %v389, %v391
      %v393 = vadd.f32 %v389, %v392
      %vm394 = vweird.f32 %v385
      %vm395 = vweird.f32 %v389
      %vm396 = vmor %vm394, %vm395
      %v397 = vsel %vm396, %v389, %v393
      %v398 = vand.u32 2147483647, %v385
      %vm399 = vcmp.eq.f32.partialorder %v398, 8.507059e+37
      %v400 = vand.u32 %v385, 2147483648
      %v401 = vor.u32 1.1754944e-38, %v400
      %v402 = vsel %vm399, %v401, %v397
      %v403 = vmul.f32 1.0, %v402
      %v404 = vrcp.pop %v386
      %v405 = vmul.f32 %v386, %v404
      %v406 = vsub.f32 1.0, %v405
      %v407 = vmul.f32 %v404, %v406
      %v408 = vadd.f32 %v404, %v407
      %vm409 = vweird.f32 %v386
      %vm410 = vweird.f32 %v404
      %vm411 = vmor %vm409, %vm410
      %v412 = vsel %vm411, %v404, %v408
      %v413 = vand.u32 2147483647, %v386
      %vm414 = vcmp.eq.f32.partialorder %v413, 8.507059e+37
      %v415 = vand.u32 %v386, 2147483648
      %v416 = vor.u32 1.1754944e-38, %v415
      %v417 = vsel %vm414, %v416, %v412
      %v418 = vmul.f32 1.0, %v417
      %v419 = vrcp.pop %v387
      %v420 = vmul.f32 %v387, %v419
      %v421 = vsub.f32 1.0, %v420
      %v422 = vmul.f32 %v419, %v421
      %v423 = vadd.f32 %v419, %v422
      %vm424 = vweird.f32 %v387
      %vm425 = vweird.f32 %v419
      %vm426 = vmor %vm424, %vm425
      %v427 = vsel %vm426, %v419, %v423
      %v428 = vand.u32 2147483647, %v387
      %vm429 = vcmp.eq.f32.partialorder %v428, 8.507059e+37
      %v430 = vand.u32 %v387, 2147483648
      %v431 = vor.u32 1.1754944e-38, %v430
      %v432 = vsel %vm429, %v431, %v427
      %v433 = vmul.f32 1.0, %v432
      %v434 = vrcp.pop %v388
      %v435 = vmul.f32 %v388, %v434
      %v436 = vsub.f32 1.0, %v435
      %v437 = vmul.f32 %v434, %v436
      %v438 = vadd.f32 %v434, %v437
      %vm439 = vweird.f32 %v388
      %vm440 = vweird.f32 %v434
      %vm441 = vmor %vm439, %vm440
      %v442 = vsel %vm441, %v434, %v438
      %v443 = vand.u32 2147483647, %v388
      %vm444 = vcmp.eq.f32.partialorder %v443, 8.507059e+37
      %v445 = vand.u32 %v388, 2147483648
      %v446 = vor.u32 1.1754944e-38, %v445
      %v447 = vsel %vm444, %v446, %v442
      %v448 = vmul.f32 1.0, %v447
      %s449 = scalar_lea.vmem %s5, 32
      %450 = vst.msk [vmem:[%s449] sm:$0xff] %vm105, %v403
      %451 = vst.msk [vmem:[%s449 + $0x8] sm:$0xff] %vm105, %v418
      %452 = vst.msk [vmem:[%s449 + $0x10] sm:$0xff] %vm105, %v433
      %453 = vst.msk [vmem:[%s449 + $0x18] sm:$0xff] %vm105, %v448
    $region33: #{tpu_custom_call.1} parent=1 // pred_fallthru
      _
    // Predicated region
    $region34: #{tpu_custom_call.1} parent=1 // pred_check
      _
    $region35: #{tpu_custom_call.1} parent=1 // pred_check_branch
      %455 = sbr.rel (0) target = $region37
    $region36: #{tpu_custom_call.1} parent=1 // pred_region
      _
    $region37: #{tpu_custom_call.1} parent=1 // pred_fallthru
      _
    // Predicated region
    $region38: #{tpu_custom_call.1} parent=1 // pred_check
      _
    $region39: #{tpu_custom_call.1} parent=1 // pred_check_branch
      %457 = sbr.rel (0) target = $region41
    $region40: #{tpu_custom_call.1} parent=1 // pred_region
      _
    $region41: #{tpu_custom_call.1} parent=1 // pred_fallthru
      _
    %458 = vsyncpa [#allocation4], 1

</llo_original>
